<compile_context>
chip_gen: v7x
topology: tpu7x:2x2x1
jax: 0.10.0
libtpu: 0.0.40
codegen_flags: <defaults>
</compile_context>

<pallas_src>
import jax
import jax.numpy as jnp
from jax.experimental import pallas as pl
from jax.experimental.pallas import tpu as pltpu


# ----------------------------- kernels ------------------------------------


def _fused_kernel(x_ref, w1_ref, w2_ref, o_ref):
    """Fused SE block for one batch element; x_ref is the (C, HW) slab."""
    x = x_ref[...]                                                   # (C, HW)
    hw = x.shape[-1]
    pool = jnp.full((hw, 1), 1.0 / hw, dtype=jnp.float32)
    # 1) squeeze: global average pool as an MXU mat-vec (keeps XLU/VPU free).
    y = jnp.dot(x, pool, preferred_element_type=jnp.float32)         # (C, 1)
    # 2) excitation MLP, column-oriented (uses torch Linear weights directly).
    h = jnp.maximum(
        jnp.dot(w1_ref[...], y, preferred_element_type=jnp.float32), 0.0)   # (Cr, 1)
    s = jax.nn.sigmoid(
        jnp.dot(w2_ref[...], h, preferred_element_type=jnp.float32))        # (C, 1)
    # 3) scale: per-channel gate broadcast along the spatial (lane) axis.
    o_ref[...] = (x * s).astype(o_ref.dtype)


def _gate_kernel(x_ref, w1_ref, w2_ref, g_ref):
    """Two-pass path, pass 1: squeeze + excitation -> per-channel gate (C, 1)."""
    x = x_ref[...]                                                   # (C, HW)
    hw = x.shape[-1]
    pool = jnp.full((hw, 1), 1.0 / hw, dtype=jnp.float32)
    y = jnp.dot(x, pool, preferred_element_type=jnp.float32)
    h = jnp.maximum(
        jnp.dot(w1_ref[...], y, preferred_element_type=jnp.float32), 0.0)
    g_ref[...] = jax.nn.sigmoid(
        jnp.dot(w2_ref[...], h, preferred_element_type=jnp.float32)
    ).astype(g_ref.dtype)


def _scale_kernel(x_ref, g_ref, o_ref):
    """Two-pass path, pass 2: elementwise per-channel scale on a tile."""
    o_ref[...] = (x_ref[...] * g_ref[...]).astype(o_ref.dtype)


# ----------------------------- helpers ------------------------------------


def _vmem_capacity_bytes():
    try:
        return int(pltpu.get_tpu_info().vmem_capacity_bytes)
    except Exception:
        return 64 << 20          # conservative: v7x per-TensorCore VMEM


def _compiler_params(semantics, need_bytes, cap_bytes):
    kwargs = dict(dimension_semantics=semantics)
    # v5e's scoped default is 16 MiB -> raise whenever we might exceed it, but
    # never above ~88% of physical VMEM (64 MiB on v7x) and never below the
    # common 32 MiB default.
    if need_bytes > (14 << 20):
        kwargs["vmem_limit_bytes"] = int(
            min(max(need_bytes + (8 << 20), 32 << 20), int(0.88 * cap_bytes)))
    return pltpu.CompilerParams(**kwargs)


def _pick_scale_tiles(C, HW):
    """Tiles for the elementwise scale pass (lane-dense, pipeline-friendly)."""
    # Only tile HW when blocks stay 128-lane aligned; otherwise keep it whole
    # (masked stores for HW < 128 are cheaper than any relayout / HBM pass).
    if HW % 128 == 0 and HW > 2048:
        hw_tile = 2048
    else:
        hw_tile = HW
    if C <= 8:
        return C, hw_tile
    by_bytes = max(1, ((1 << 20) // 4) // hw_tile)   # ~1 MiB f32 blocks
    by_parallel = pl.cdiv(C, 4)                      # >= 4 grid steps per batch
    c_tile = min(C, by_bytes, by_parallel)
    c_tile = max(8, (c_tile // 8) * 8)               # sublane-aligned
    if c_tile >= C:
        c_tile = C
    return c_tile, hw_tile


# ----------------------------- wrapper ------------------------------------


def sesa_se_block(x_nchw, w1, w2, *, two_pass=None):
    """SE block forward.

    x_nchw: (B, C, H, W) float32
    w1:     (C//r, C)  -- fc[0].weight (PyTorch nn.Linear layout: out x in)
    w2:     (C, C//r)  -- fc[2].weight
    two_pass: force (True) / forbid (False) the two-pass structure; None = auto.
    """
    B, C, H, W = x_nchw.shape
    HW = H * W
    Cr, Cin = w1.shape
    assert Cin == C and w2.shape == (C, Cr)

    x3 = x_nchw.reshape(B, C, HW)        # contiguity-preserving, no HBM pass
    itemsize = 4
    slab_bytes = C * HW * itemsize
    w_bytes = 2 * C * Cr * itemsize
    cap = _vmem_capacity_bytes()
    budget = int(0.85 * cap)

    # Fused path double-buffers the input and output slabs (+ tiny weights).
    fused_need = 4 * slab_bytes + 4 * w_bytes + (1 << 20)
    if two_pass is None:
        # Two-pass when the fused slabs don't fit VMEM, or when B is too small
        # to hide per-batch DMAs / feed both v7x TensorCores.
        two_pass = (fused_need > budget) or (B <= 4 and slab_bytes >= (8 << 20))

    if not two_pass:
        out3 = pl.pallas_call(
            _fused_kernel,
            out_shape=jax.ShapeDtypeStruct((B, C, HW), x3.dtype),
            grid_spec=pltpu.PrefetchScalarGridSpec(
                num_scalar_prefetch=0,
                grid=(B,),
                in_specs=[
                    pl.BlockSpec((None, C, HW), lambda b: (b, 0, 0)),
                    pl.BlockSpec((Cr, C), lambda b: (0, 0)),
                    pl.BlockSpec((C, Cr), lambda b: (0, 0)),
                ],
                out_specs=pl.BlockSpec((None, C, HW), lambda b: (b, 0, 0)),
            ),
            compiler_params=_compiler_params(("parallel",), fused_need, cap),
            cost_estimate=pl.CostEstimate(
                flops=int(3 * B * C * HW + 4 * B * C * Cr),
                transcendentals=int(B * C),
                bytes_accessed=int(2 * B * slab_bytes + w_bytes),
            ),
        )(x3, w1, w2)
        return out3.reshape(B, C, H, W)

    # -------------------------- two-pass path -----------------------------
    # Pass 1: per-batch gates (read-only slab, so only 2x input buffering).
    gate_need = 2 * slab_bytes + 4 * w_bytes + (1 << 20)
    # TODO(synk): if even a single read-only slab exceeds the VMEM budget,
    # chunk the pooling over HW with an "arbitrary" reduction grid axis.
    gates = pl.pallas_call(
        _gate_kernel,
        out_shape=jax.ShapeDtypeStruct((B, C, 1), jnp.float32),
        grid_spec=pltpu.PrefetchScalarGridSpec(
            num_scalar_prefetch=0,
            grid=(B,),
            in_specs=[
                pl.BlockSpec((None, C, HW), lambda b: (b, 0, 0)),
                pl.BlockSpec((Cr, C), lambda b: (0, 0)),
                pl.BlockSpec((C, Cr), lambda b: (0, 0)),
            ],
            out_specs=pl.BlockSpec((None, C, 1), lambda b: (b, 0, 0)),
        ),
        compiler_params=_compiler_params(("parallel",), gate_need, cap),
        cost_estimate=pl.CostEstimate(
            flops=int(2 * B * C * HW + 4 * B * C * Cr),
            transcendentals=int(B * C),
            bytes_accessed=int(B * slab_bytes + w_bytes + B * C * itemsize),
        ),
    )(x3, w1, w2)

    # Pass 2: tiled elementwise scale; deep pipeline, all axes parallel.
    c_tile, hw_tile = _pick_scale_tiles(C, HW)
    n_c = pl.cdiv(C, c_tile)
    n_hw = pl.cdiv(HW, hw_tile)
    scale_need = (4 * c_tile * hw_tile * itemsize
                  + 4 * c_tile * itemsize + (1 << 20))
    out3 = pl.pallas_call(
        _scale_kernel,
        out_shape=jax.ShapeDtypeStruct((B, C, HW), x3.dtype),
        grid_spec=pltpu.PrefetchScalarGridSpec(
            num_scalar_prefetch=0,
            grid=(B, n_c, n_hw),
            in_specs=[
                pl.BlockSpec((None, c_tile, hw_tile),
                             lambda b, i, j: (b, i, j)),
                pl.BlockSpec((None, c_tile, 1),
                             lambda b, i, j: (b, i, 0)),
            ],
            out_specs=pl.BlockSpec((None, c_tile, hw_tile),
                                   lambda b, i, j: (b, i, j)),
        ),
        compiler_params=_compiler_params(
            ("parallel", "parallel", "parallel"), scale_need, cap),
        cost_estimate=pl.CostEstimate(
            flops=int(B * C * HW),
            transcendentals=0,
            bytes_accessed=int(2 * B * slab_bytes + B * C * itemsize),
        ),
    )(x3, gates)
    return out3.reshape(B, C, H, W)


# ----------------------------- reference ----------------------------------


def _reference(x_nchw, w1, w2):
    """Pure-JAX reference mirroring the PyTorch forward."""
    y = jnp.mean(x_nchw, axis=(2, 3))                 # (B, C)
    y = jnp.maximum(y @ w1.T, 0.0)                    # (B, C//r)
    y = jax.nn.sigmoid(y @ w2.T)                      # (B, C)
    return x_nchw * y[:, :, None, None]


if __name__ == "__main__":
    key = jax.random.PRNGKey(0)
    ok = True

    # Case 1: module-consistent small shape (fused single-pass path).
    B, C, H, W = 2, 4, 16, 16
    Cr = C // 2
    kx, k1, k2, key = jax.random.split(key, 4)
    x = jax.random.normal(kx, (B, C, H, W), dtype=jnp.float32)
    w1 = jax.random.normal(k1, (Cr, C), dtype=jnp.float32) * 0.5   # fc[0].weight
    w2 = jax.random.normal(k2, (C, Cr), dtype=jnp.float32) * 0.5   # fc[2].weight
    out = jax.block_until_ready(sesa_se_block(x, w1, w2))
    ref = _reference(x, w1, w2)
    ok &= out.shape == (B, C, H, W)
    ok &= bool(jnp.allclose(out, ref, atol=1e-4, rtol=1e-4))

    # Case 2: typical SE shape with lane-unfriendly HW (fused, no transposes).
    B2, C2, H2, W2 = 2, 128, 7, 7
    Cr2 = C2 // 4
    kx, k1, k2, key = jax.random.split(key, 4)
    x2 = jax.random.normal(kx, (B2, C2, H2, W2), dtype=jnp.float32)
    w1b = jax.random.normal(k1, (Cr2, C2), dtype=jnp.float32) * 0.1
    w2b = jax.random.normal(k2, (C2, Cr2), dtype=jnp.float32) * 0.1
    out2 = jax.block_until_ready(sesa_se_block(x2, w1b, w2b))
    ref2 = _reference(x2, w1b, w2b)
    ok &= out2.shape == (B2, C2, H2, W2)
    ok &= bool(jnp.allclose(out2, ref2, atol=2e-3, rtol=2e-3))

    # Case 3: force the two-pass (gates kernel + tiled scale kernel) path.
    B3, C3, H3, W3 = 1, 64, 16, 16
    Cr3 = C3 // 4
    kx, k1, k2, key = jax.random.split(key, 4)
    xc = jax.random.normal(kx, (B3, C3, H3, W3), dtype=jnp.float32)
    w1c = jax.random.normal(k1, (Cr3, C3), dtype=jnp.float32) * 0.1
    w2c = jax.random.normal(k2, (C3, Cr3), dtype=jnp.float32) * 0.1
    out3 = jax.block_until_ready(sesa_se_block(xc, w1c, w2c, two_pass=True))
    ref3 = _reference(xc, w1c, w2c)
    ok &= out3.shape == (B3, C3, H3, W3)
    ok &= bool(jnp.allclose(out3, ref3, atol=1e-3, rtol=1e-3))

    assert ok, "mismatch vs reference"
    print("KERNEL_OK")
</pallas_src>

<mosaic_0001>
module attributes {stable_mosaic.version = 11 : i64} {
  func.func @_fused_kernel(%arg0: i32, %arg1: memref<1x4x256xf32, #tpu.memory_space<vmem>>, %arg2: memref<2x4xf32, #tpu.memory_space<vmem>>, %arg3: memref<4x2xf32, #tpu.memory_space<vmem>>, %arg4: memref<1x4x256xf32, #tpu.memory_space<vmem>>) attributes {dimension_semantics = [#tpu.dimension_semantics<parallel>], iteration_bounds = array<i64: 2>, scalar_prefetch = 0 : i64, scratch_operands = 0 : i64, tpu.core_type = #tpu.core_type<tc>, window_params = [{transform_indices = @transform_0, window_bounds = array<i64: 1, 4, 256>}, {pipeline_mode = #tpu.pipeline_mode<synchronous>, transform_indices = @transform_1, window_bounds = array<i64: 2, 4>}, {pipeline_mode = #tpu.pipeline_mode<synchronous>, transform_indices = @transform_2, window_bounds = array<i64: 4, 2>}, {transform_indices = @transform_3, window_bounds = array<i64: 1, 4, 256>}]} {
    %c0 = arith.constant 0 : index
    %c0_0 = arith.constant 0 : index
    %c0_1 = arith.constant 0 : index
    %0 = vector.load %arg1[%c0, %c0_0, %c0_1] : memref<1x4x256xf32, #tpu.memory_space<vmem>>, vector<1x4x256xf32>
    %1 = vector.shape_cast %0 : vector<1x4x256xf32> to vector<4x256xf32>
    %cst = arith.constant 3.906250e-03 : f32
    %2 = vector.broadcast %cst : f32 to vector<256x1xf32>
    %cst_2 = arith.constant dense<0.000000e+00> : vector<4x1xf32>
    %3 = tpu.matmul %1, %2, %cst_2 {dimension_numbers = #tpu.dot_dimension_numbers<[1], [0], [0], [1], [0, 0, 1, 1], [], []>} : vector<4x256xf32>, vector<256x1xf32>, vector<4x1xf32> -> vector<4x1xf32>
    %c0_3 = arith.constant 0 : index
    %c0_4 = arith.constant 0 : index
    %4 = vector.load %arg2[%c0_3, %c0_4] : memref<2x4xf32, #tpu.memory_space<vmem>>, vector<2x4xf32>
    %cst_5 = arith.constant dense<0.000000e+00> : vector<2x1xf32>
    %5 = tpu.matmul %4, %3, %cst_5 {dimension_numbers = #tpu.dot_dimension_numbers<[1], [0], [0], [1], [0, 0, 1, 1], [], []>} : vector<2x4xf32>, vector<4x1xf32>, vector<2x1xf32> -> vector<2x1xf32>
    %cst_6 = arith.constant 0.000000e+00 : f32
    %6 = vector.broadcast %cst_6 : f32 to vector<2x1xf32>
    %7 = arith.maximumf %5, %6 : vector<2x1xf32>
    %c0_7 = arith.constant 0 : index
    %c0_8 = arith.constant 0 : index
    %8 = vector.load %arg3[%c0_7, %c0_8] : memref<4x2xf32, #tpu.memory_space<vmem>>, vector<4x2xf32>
    %cst_9 = arith.constant dense<0.000000e+00> : vector<4x1xf32>
    %9 = tpu.matmul %8, %7, %cst_9 {dimension_numbers = #tpu.dot_dimension_numbers<[1], [0], [0], [1], [0, 0, 1, 1], [], []>} : vector<4x2xf32>, vector<2x1xf32>, vector<4x1xf32> -> vector<4x1xf32>
    %10 = arith.negf %9 : vector<4x1xf32>
    %11 = math.exp %10 : vector<4x1xf32>
    %cst_10 = arith.constant 1.000000e+00 : f32
    %12 = vector.broadcast %cst_10 : f32 to vector<4x1xf32>
    %13 = arith.addf %12, %11 : vector<4x1xf32>
    %14 = arith.divf %12, %13 : vector<4x1xf32>
    %15 = vector.broadcast %14 : vector<4x1xf32> to vector<4x256xf32>
    %16 = arith.mulf %1, %15 : vector<4x256xf32>
    %c0_11 = arith.constant 0 : index
    %c0_12 = arith.constant 0 : index
    %c0_13 = arith.constant 0 : index
    %17 = vector.load %arg4[%c0_11, %c0_12, %c0_13] : memref<1x4x256xf32, #tpu.memory_space<vmem>>, vector<1x4x256xf32>
    %18 = vector.shape_cast %17 : vector<1x4x256xf32> to vector<4x256xf32>
    %19 = vector.shape_cast %16 : vector<4x256xf32> to vector<1x4x256xf32>
    tpu.vector_store %arg4[%c0_11, %c0_12, %c0_13], %19 {strides = array<i32>} : memref<1x4x256xf32, #tpu.memory_space<vmem>>, vector<1x4x256xf32>,
    return
  }
  func.func @transform_0(%arg0: i32) -> (i32, i32, i32) {
    %c0_i32 = arith.constant 0 : i32
    %c0_i32_0 = arith.constant 0 : i32
    %c0_i32_1 = arith.constant 0 : i32
    return %arg0, %c0_i32, %c0_i32_0 : i32, i32, i32
  }
  func.func @transform_1(%arg0: i32) -> (i32, i32) {
    %c0_i32 = arith.constant 0 : i32
    %c0_i32_0 = arith.constant 0 : i32
    %c0_i32_1 = arith.constant 0 : i32
    return %c0_i32, %c0_i32_0 : i32, i32
  }
  func.func @transform_2(%arg0: i32) -> (i32, i32) {
    %c0_i32 = arith.constant 0 : i32
    %c0_i32_0 = arith.constant 0 : i32
    %c0_i32_1 = arith.constant 0 : i32
    return %c0_i32, %c0_i32_0 : i32, i32
  }
  func.func @transform_3(%arg0: i32) -> (i32, i32, i32) {
    %c0_i32 = arith.constant 0 : i32
    %c0_i32_0 = arith.constant 0 : i32
    %c0_i32_1 = arith.constant 0 : i32
    return %arg0, %c0_i32, %c0_i32_0 : i32, i32, i32
  }
}

</mosaic_0001>

<llo_original>
// kernel: tpu_custom_call.1
$region0: #{tpu_custom_call.1}
  #allocation0 [shape = 'u32[]', space=smem, size = 0x4, offset = 0x4, fixed_abs, tag = 'smem constant byte address 0x4 - core index']
  #allocation1 [shape = 'u32[144,128]{1,0:T(1,128)}', space=vmem, size = 0x12000, scoped, tag = 'internal scratch']
  %s0 = inlined_call_operand.hbm [shape: f32[2,4,256], index: 0, kind: input, shape index: {}]
  %s1 = inlined_call_operand.vmem [shape: f32[2,4], index: 1, kind: input, shape index: {}]
  %s2 = inlined_call_operand.vmem [shape: f32[4,2], index: 2, kind: input, shape index: {}]
  %s3 = inlined_call_operand.hbm [shape: f32[2,4,256], index: 3, kind: output, shape index: {}]
  %s4 = sld [smem:[#allocation0]]
  $region49: #{tpu_custom_call.1} parent=0
    _
  %s6 = ssub.s32 1, %s4
  %s7 = scalar_select 0, %s6, %s4
  $region1: #{tpu_custom_call.1} parent=0
    #allocation2 [shape = 'u8[8192]{0}', space=vmem, size = 0x2000, scoped, tag = 'input window, operand 0']
    #allocation3 [shape = 's32[2]{0}', space=sflag, size = 0x8, scoped, tag = 'scoped memory for tpu_custom_call.1']
    #allocation4 [shape = 's32[2]{0}', space=sflag, size = 0x8, scoped, tag = 'scoped memory for tpu_custom_call.1']
    #allocation5 [shape = 'u8[8192]{0}', space=vmem, size = 0x2000, scoped, tag = 'output window, operand 0']
    %8 = vsyncpa [#allocation3], 0
    %s9 = scalar_lea.sflag [#allocation3], 1
    %10 = vsyncpa %s9, 0
    %11 = vsyncpa [#allocation4], 0
    %s12 = scalar_lea.sflag [#allocation4], 1
    %13 = vsyncpa %s12, 0
    loop: start=0, step=1, limit=4
    $region2: #{tpu_custom_call.1} parent=1 // loop_pre_header
      _
    $region3: #{tpu_custom_call.1} parent=1 // loop_header
      %s15 = sphi 0, %s19
      %p16 = scmp.ge.s32.totalorder %s15, 4
      %s25 = sphi 0, %s27
      %s28 = sphi 0, %s25
      %s29 = sphi 0, %s28
      %s45 = sphi 0, %s29
      %s49 = sphi 0, %s49
      %s51 = sphi 0, %s49
      %s52 = sphi 0, %s51
      %s66 = sphi 0, %s52
      %s70 = sphi 0, %s70
      %s72 = sphi 0, %s70
      %s73 = sphi 0, %s72
      %s87 = sphi 0, %s73
      %s93 = sphi 0, %s95
      %s96 = sphi 0, %s93
      %s97 = sphi 0, %s96
      %s113 = sphi 0, %s97
    $region4: #{tpu_custom_call.1} parent=1 // loop_header_branch
      %18 = sbr.rel (%p16) target = $region8
    $region5: #{tpu_custom_call.1} parent=1 // loop_body
      %s20 = ssub.s32 %s15, 1
      %s21 = ssub.s32 %s15, 2
      %s22 = sadd.s32 %s15, 1
      %s23 = ssub.s32 %s15, %s22
      %p24 = scmp.eq.s32.totalorder %s23, 0
      %s26 = sadd.s32 %s25, 1
      %s27 = scalar_select %p24, %s25, %s26
      %p30 = pneg %p24
      %p31 = scmp.eq.s32.totalorder %s15, 1
      %p32 = por %p30, %p31
      %p33 = scmp.ne.s32.totalorder %s25, %s28
      %p34 = scmp.eq.s32.totalorder %s15, 0
      %p35 = por %p33, %p34
      %p36 = scmp.ne.s32.totalorder %s25, %s28
      %p37 = scmp.eq.s32.totalorder %s20, 1
      %p38 = por %p36, %p37
      %p39 = scmp.ne.s32.totalorder %s28, %s29
      %p40 = scmp.eq.s32.totalorder %s20, 0
      %p41 = por %p39, %p40
      %p42 = scmp.ne.s32.totalorder %s28, %s29
      %p43 = scmp.eq.s32.totalorder %s21, 1
      %p44 = por %p42, %p43
      %p46 = scmp.ne.s32.totalorder %s29, %s45
      %p47 = scmp.eq.s32.totalorder %s21, 0
      %p48 = por %p46, %p47
      %s50 = sadd.s32 %s49, 1
      %p53 = scmp.eq.s32.totalorder %s15, 1
      %p54 = scmp.ne.s32.totalorder %s49, %s51
      %p55 = scmp.eq.s32.totalorder %s15, 0
      %p56 = por %p54, %p55
      %p57 = scmp.ne.s32.totalorder %s49, %s51
      %p58 = scmp.eq.s32.totalorder %s20, 1
      %p59 = por %p57, %p58
      %p60 = scmp.ne.s32.totalorder %s51, %s52
      %p61 = scmp.eq.s32.totalorder %s20, 0
      %p62 = por %p60, %p61
      %p63 = scmp.ne.s32.totalorder %s51, %s52
      %p64 = scmp.eq.s32.totalorder %s21, 1
      %p65 = por %p63, %p64
      %p67 = scmp.ne.s32.totalorder %s52, %s66
      %p68 = scmp.eq.s32.totalorder %s21, 0
      %p69 = por %p67, %p68
      %s71 = sadd.s32 %s70, 1
      %p74 = scmp.eq.s32.totalorder %s15, 1
      %p75 = scmp.ne.s32.totalorder %s70, %s72
      %p76 = scmp.eq.s32.totalorder %s15, 0
      %p77 = por %p75, %p76
      %p78 = scmp.ne.s32.totalorder %s70, %s72
      %p79 = scmp.eq.s32.totalorder %s20, 1
      %p80 = por %p78, %p79
      %p81 = scmp.ne.s32.totalorder %s72, %s73
      %p82 = scmp.eq.s32.totalorder %s20, 0
      %p83 = por %p81, %p82
      %p84 = scmp.ne.s32.totalorder %s72, %s73
      %p85 = scmp.eq.s32.totalorder %s21, 1
      %p86 = por %p84, %p85
      %p88 = scmp.ne.s32.totalorder %s73, %s87
      %p89 = scmp.eq.s32.totalorder %s21, 0
      %p90 = por %p88, %p89
      %s91 = ssub.s32 %s15, %s22
      %p92 = scmp.eq.s32.totalorder %s91, 0
      %s94 = sadd.s32 %s93, 1
      %s95 = scalar_select %p92, %s93, %s94
      %p98 = pneg %p92
      %p99 = scmp.eq.s32.totalorder %s15, 1
      %p100 = por %p98, %p99
      %p101 = scmp.ne.s32.totalorder %s93, %s96
      %p102 = scmp.eq.s32.totalorder %s15, 0
      %p103 = por %p101, %p102
      %p104 = scmp.ne.s32.totalorder %s93, %s96
      %p105 = scmp.eq.s32.totalorder %s20, 1
      %p106 = por %p104, %p105
      %p107 = scmp.ne.s32.totalorder %s96, %s97
      %p108 = scmp.eq.s32.totalorder %s20, 0
      %p109 = por %p107, %p108
      %p110 = scmp.ne.s32.totalorder %s96, %s97
      %p111 = scmp.eq.s32.totalorder %s21, 1
      %p112 = por %p110, %p111
      %p114 = scmp.ne.s32.totalorder %s97, %s113
      %p115 = scmp.eq.s32.totalorder %s21, 0
      %p116 = por %p114, %p115
      %p117 = scmp.le.s32.totalorder 1, %s15
      %p118 = scmp.lt.s32.totalorder %s15, 3
      %p119 = pnand %p117, %p118
      %p120 = pneg %p119
      // Predicated region
      $region9: #{tpu_custom_call.1} parent=5 // pred_check
        _
      $region10: #{tpu_custom_call.1} parent=5 // pred_check_branch
        %122 = sbr.rel (%p119) target = $region12
      $region11: #{tpu_custom_call.1} parent=5 // pred_region
        %s123 = ssub.s32 %s15, 1
        // Predicated region
        $region13: #{tpu_custom_call.1} parent=11 // pred_check
          %p124 = pneg %p62
        $region14: #{tpu_custom_call.1} parent=11 // pred_check_branch
          %126 = sbr.rel (%p124) target = $region16
        $region15: #{tpu_custom_call.1} parent=11 // pred_region
          _
        $region16: #{tpu_custom_call.1} parent=11 // pred_fallthru
          _
        // Predicated region
        $region17: #{tpu_custom_call.1} parent=11 // pred_check
          %p127 = pneg %p83
        $region18: #{tpu_custom_call.1} parent=11 // pred_check_branch
          %129 = sbr.rel (%p127) target = $region20
        $region19: #{tpu_custom_call.1} parent=11 // pred_region
          _
        $region20: #{tpu_custom_call.1} parent=11 // pred_fallthru
          _
      $region12: #{tpu_custom_call.1} parent=5 // pred_fallthru
        _
      %p130 = scmp.lt.s32.totalorder %s15, 2
      // Predicated region
      $region21: #{tpu_custom_call.1} parent=5 // pred_check
        %p131 = pneg %p130
      $region22: #{tpu_custom_call.1} parent=5 // pred_check_branch
        %133 = sbr.rel (%p131) target = $region24
      $region23: #{tpu_custom_call.1} parent=5 // pred_region
        // Predicated region
        $region25: #{tpu_custom_call.1} parent=23 // pred_check
          %p134 = pneg %p35
        $region26: #{tpu_custom_call.1} parent=23 // pred_check_branch
          %136 = sbr.rel (%p134) target = $region28
        $region27: #{tpu_custom_call.1} parent=23 // pred_region
          %s137 = sand.u32 %s25, 1
          %s138 = scalar_lea.sflag [#allocation3], %s137
          %s139 = sand.u32 %s25, 1
          %s140 = smul.addr %s139, 8
          %s141 = scalar_lea.vmem [#allocation2], %s140
          %s143 = ssub.s32 128, 128
          %144 = vsyncadd %s138, %s143
          %s145 = smul.addr %s15, 2
          %s146 = smul.addr %s145, 64
          %s147 = scalar_lea.hbm %s0, %s146
          %s149 = sshll.u32 %s141, 4
          %s150 = int_to_ptr.vmem [resolvable:$true] %s149
          %152 = dma.hbm_to_vmem [thread:$0]  %s147, 128, %s150, %s138
        $region28: #{tpu_custom_call.1} parent=23 // pred_fallthru
          _
      $region24: #{tpu_custom_call.1} parent=5 // pred_fallthru
        _
      %p153 = scmp.le.s32.totalorder 1, %s15
      %p154 = scmp.lt.s32.totalorder %s15, 3
      %p155 = pnand %p153, %p154
      %p156 = pneg %p155
      // Predicated region
      $region29: #{tpu_custom_call.1} parent=5 // pred_check
        _
      $region30: #{tpu_custom_call.1} parent=5 // pred_check_branch
        %158 = sbr.rel (%p155) target = $region32
      $region31: #{tpu_custom_call.1} parent=5 // pred_region
        %s159 = ssub.s32 %s15, 1
        %s160 = sand.u32 %s28, 1
        %s161 = scalar_lea.sflag [#allocation3], %s160
        %s162 = sand.u32 %s28, 1
        %s163 = smul.addr %s162, 8
        %s164 = scalar_lea.vmem [#allocation2], %s163
        // Predicated region
        $region33: #{tpu_custom_call.1} parent=31 // pred_check
          %p165 = pneg %p41
        $region34: #{tpu_custom_call.1} parent=31 // pred_check_branch
          %167 = sbr.rel (%p165) target = $region36
        $region35: #{tpu_custom_call.1} parent=31 // pred_region
          %168 = dma.done %s161, 128
        $region36: #{tpu_custom_call.1} parent=31 // pred_fallthru
          _
        %s169 = sand.u32 %s28, 1
        %s170 = scalar_lea.sflag [#allocation3], %s169
        %s171 = sand.u32 %s28, 1
        %s172 = smul.addr %s171, 8
        %s173 = scalar_lea.vmem [#allocation2], %s172
        %p174 = pneg %p41
        %p175 = pneg %p38
        %p176 = pneg %p62
        %p177 = pneg %p59
        %p178 = pneg %p83
        %p179 = pneg %p80
        %p180 = pneg %p109
        %p181 = pneg %p106
        %s182 = sand.u32 %s96, 1
        %s183 = scalar_lea.sflag [#allocation4], %s182
        %s184 = sand.u32 %s96, 1
        %s185 = smul.addr %s184, 8
        %s186 = scalar_lea.vmem [#allocation5], %s185
        %v187 = vld [vmem:[%s164] sm:$0xff]
        %v189 = vcombine.high %v187, %v187
        %191 = vmatprep.subr.mxu0 0.0
        %192 = vmatpush1.msra.mxu0 0.00390625
        %193 = vmatprep.subr.mxu0 0.0
        %194 = vmatpush1.msra.mxu0 0.00390625
        %195 = vmatprep.subr.mxu0 0.0
        %196 = vmatpush1.msra.mxu0 0.00390625
        %197 = vmatprep.subr.mxu0 0.0
        %198 = vmatpush1.msra.mxu0 0.00390625
        %199 = vmatprep.subr.mxu0 0.0
        %200 = vmatpush1.msra.mxu0 0.00390625
        %201 = vmatprep.subr.mxu0 0.0
        %202 = vmatpush1.msra.mxu0 0.00390625
        %203 = vmatprep.subr.mxu0 0.0
        %204 = vmatpush1.msra.mxu0 0.00390625
        %205 = vmatprep.subr.mxu0 0.0
        %206 = vmatpush1.msra.mxu0 0.00390625
        %207 = vmatprep.subr.mxu0 0.0
        %208 = vmatpush1.msra.mxu0 0.00390625
        %209 = vmatprep.subr.mxu0 0.0
        %210 = vmatpush1.msra.mxu0 0.00390625
        %211 = vmatprep.subr.mxu0 0.0
        %212 = vmatpush1.msra.mxu0 0.00390625
        %213 = vmatprep.subr.mxu0 0.0
        %214 = vmatpush1.msra.mxu0 0.00390625
        %215 = vmatprep.subr.mxu0 0.0
        %216 = vmatpush1.msra.mxu0 0.00390625
        %217 = vmatprep.subr.mxu0 0.0
        %218 = vmatpush1.msra.mxu0 0.00390625
        %219 = vmatprep.subr.mxu0 0.0
        %220 = vmatpush1.msra.mxu0 0.00390625
        %221 = vmatprep.subr.mxu0 0.0
        %222 = vmatpush1.msra.mxu0 0.00390625
        %223 = vmatprep.subr.mxu0 0.0
        %224 = vmatpush1.msra.mxu0 0.00390625
        %225 = vmatprep.subr.mxu0 0.0
        %226 = vmatpush1.msra.mxu0 0.00390625
        %227 = vmatprep.subr.mxu0 0.0
        %228 = vmatpush1.msra.mxu0 0.00390625
        %229 = vmatprep.subr.mxu0 0.0
        %230 = vmatpush1.msra.mxu0 0.00390625
        %231 = vmatprep.subr.mxu0 0.0
        %232 = vmatpush1.msra.mxu0 0.00390625
        %233 = vmatprep.subr.mxu0 0.0
        %234 = vmatpush1.msra.mxu0 0.00390625
        %235 = vmatprep.subr.mxu0 0.0
        %236 = vmatpush1.msra.mxu0 0.00390625
        %237 = vmatprep.subr.mxu0 0.0
        %238 = vmatpush1.msra.mxu0 0.00390625
        %239 = vmatprep.subr.mxu0 0.0
        %240 = vmatpush1.msra.mxu0 0.00390625
        %241 = vmatprep.subr.mxu0 0.0
        %242 = vmatpush1.msra.mxu0 0.00390625
        %243 = vmatprep.subr.mxu0 0.0
        %244 = vmatpush1.msra.mxu0 0.00390625
        %245 = vmatprep.subr.mxu0 0.0
        %246 = vmatpush1.msra.mxu0 0.00390625
        %247 = vmatprep.subr.mxu0 0.0
        %248 = vmatpush1.msra.mxu0 0.00390625
        %249 = vmatprep.subr.mxu0 0.0
        %250 = vmatpush1.msra.mxu0 0.00390625
        %251 = vmatprep.subr.mxu0 0.0
        %252 = vmatpush1.msra.mxu0 0.00390625
        %253 = vmatprep.subr.mxu0 0.0
        %254 = vmatpush1.msra.mxu0 0.00390625
        %255 = vmatprep.mubr.f32.mxu0 %v189
        %256 = vmatmul.mubr.f32.gmra.mrb[0].mxu0 %v187
        %v257 = vpop.f32.mrb[0].mxu0
        %v258 = vadd.f32 0.0, %v257
        %v259 = vpop.f32.mrb[0].mxu0
        %260 = vdwg.mxu0
        %v261 = vld [vmem:[%s1] sm:$0x3]
        %vm262 = vcmask 31744
        %v264 = vsel %vm262, %v261, 0
        %vm266 = vcmask 1043456
        %v268 = vsel %vm266, %v258, 0
        %270 = vmatprep.subr.mxu0 0.0
        %271 = vmatpush1.msra.mxu0 %v268
        %272 = vmatprep.subr.mxu0 0.0
        %273 = vmatpush1.msra.mxu0 0.0
        %274 = vmatprep.subr.mxu0 0.0
        %275 = vmatpush1.msra.mxu0 0.0
        %276 = vmatprep.subr.mxu0 0.0
        %277 = vmatpush1.msra.mxu0 0.0
        %278 = vmatprep.subr.mxu0 0.0
        %279 = vmatpush1.msra.mxu0 0.0
        %280 = vmatprep.subr.mxu0 0.0
        %281 = vmatpush1.msra.mxu0 0.0
        %282 = vmatprep.subr.mxu0 0.0
        %283 = vmatpush1.msra.mxu0 0.0
        %284 = vmatprep.subr.mxu0 0.0
        %285 = vmatpush1.msra.mxu0 0.0
        %286 = vmatprep.subr.mxu0 0.0
        %287 = vmatpush1.msra.mxu0 0.0
        %288 = vmatprep.subr.mxu0 0.0
        %289 = vmatpush1.msra.mxu0 0.0
        %290 = vmatprep.subr.mxu0 0.0
        %291 = vmatpush1.msra.mxu0 0.0
        %292 = vmatprep.subr.mxu0 0.0
        %293 = vmatpush1.msra.mxu0 0.0
        %294 = vmatprep.subr.mxu0 0.0
        %295 = vmatpush1.msra.mxu0 0.0
        %296 = vmatprep.subr.mxu0 0.0
        %297 = vmatpush1.msra.mxu0 0.0
        %298 = vmatprep.subr.mxu0 0.0
        %299 = vmatpush1.msra.mxu0 0.0
        %300 = vmatprep.subr.mxu0 0.0
        %301 = vmatpush1.msra.mxu0 0.0
        %302 = vmatprep.subr.mxu0 0.0
        %303 = vmatpush1.msra.mxu0 0.0
        %304 = vmatprep.subr.mxu0 0.0
        %305 = vmatpush1.msra.mxu0 0.0
        %306 = vmatprep.subr.mxu0 0.0
        %307 = vmatpush1.msra.mxu0 0.0
        %308 = vmatprep.subr.mxu0 0.0
        %309 = vmatpush1.msra.mxu0 0.0
        %310 = vmatprep.subr.mxu0 0.0
        %311 = vmatpush1.msra.mxu0 0.0
        %312 = vmatprep.subr.mxu0 0.0
        %313 = vmatpush1.msra.mxu0 0.0
        %314 = vmatprep.subr.mxu0 0.0
        %315 = vmatpush1.msra.mxu0 0.0
        %316 = vmatprep.subr.mxu0 0.0
        %317 = vmatpush1.msra.mxu0 0.0
        %318 = vmatprep.subr.mxu0 0.0
        %319 = vmatpush1.msra.mxu0 0.0
        %320 = vmatprep.subr.mxu0 0.0
        %321 = vmatpush1.msra.mxu0 0.0
        %322 = vmatprep.subr.mxu0 0.0
        %323 = vmatpush1.msra.mxu0 0.0
        %324 = vmatprep.subr.mxu0 0.0
        %325 = vmatpush1.msra.mxu0 0.0
        %326 = vmatprep.subr.mxu0 0.0
        %327 = vmatpush1.msra.mxu0 0.0
        %328 = vmatprep.subr.mxu0 0.0
        %329 = vmatpush1.msra.mxu0 0.0
        %330 = vmatprep.subr.mxu0 0.0
        %331 = vmatpush1.msra.mxu0 0.0
        %332 = vmatprep.subr.mxu0 0.0
        %333 = vmatpush1.msra.mxu0 0.0
        %334 = vmatprep.mubr.f32.mxu0 0.0
        %335 = vmatmul.mubr.f32.gmra.mrb[0].mxu0 %v264
        %v336 = vpop.f32.mrb[0].mxu0
        %v337 = vadd.f32 0.0, %v336
        %v338 = vpop.f32.mrb[0].mxu0
        %339 = vdwg.mxu0
        %v340 = vmax.f32 %v337, 0.0
        %v341 = vld [vmem:[%s2] sm:$0xf]
        %vm342 = vcmask 15360
        %v344 = vsel %vm342, %v341, 0
        %vm346 = vcmask 1041408
        %v348 = vsel %vm346, %v340, 0
        %350 = vmatprep.subr.mxu0 0.0
        %351 = vmatpush1.msra.mxu0 %v348
        %352 = vmatprep.subr.mxu0 0.0
        %353 = vmatpush1.msra.mxu0 0.0
        %354 = vmatprep.subr.mxu0 0.0
        %355 = vmatpush1.msra.mxu0 0.0
        %356 = vmatprep.subr.mxu0 0.0
        %357 = vmatpush1.msra.mxu0 0.0
        %358 = vmatprep.subr.mxu0 0.0
        %359 = vmatpush1.msra.mxu0 0.0
        %360 = vmatprep.subr.mxu0 0.0
        %361 = vmatpush1.msra.mxu0 0.0
        %362 = vmatprep.subr.mxu0 0.0
        %363 = vmatpush1.msra.mxu0 0.0
        %364 = vmatprep.subr.mxu0 0.0
        %365 = vmatpush1.msra.mxu0 0.0
        %366 = vmatprep.subr.mxu0 0.0
        %367 = vmatpush1.msra.mxu0 0.0
        %368 = vmatprep.subr.mxu0 0.0
        %369 = vmatpush1.msra.mxu0 0.0
        %370 = vmatprep.subr.mxu0 0.0
        %371 = vmatpush1.msra.mxu0 0.0
        %372 = vmatprep.subr.mxu0 0.0
        %373 = vmatpush1.msra.mxu0 0.0
        %374 = vmatprep.subr.mxu0 0.0
        %375 = vmatpush1.msra.mxu0 0.0
        %376 = vmatprep.subr.mxu0 0.0
        %377 = vmatpush1.msra.mxu0 0.0
        %378 = vmatprep.subr.mxu0 0.0
        %379 = vmatpush1.msra.mxu0 0.0
        %380 = vmatprep.subr.mxu0 0.0
        %381 = vmatpush1.msra.mxu0 0.0
        %382 = vmatprep.subr.mxu0 0.0
        %383 = vmatpush1.msra.mxu0 0.0
        %384 = vmatprep.subr.mxu0 0.0
        %385 = vmatpush1.msra.mxu0 0.0
        %386 = vmatprep.subr.mxu0 0.0
        %387 = vmatpush1.msra.mxu0 0.0
        %388 = vmatprep.subr.mxu0 0.0
        %389 = vmatpush1.msra.mxu0 0.0
        %390 = vmatprep.subr.mxu0 0.0
        %391 = vmatpush1.msra.mxu0 0.0
        %392 = vmatprep.subr.mxu0 0.0
        %393 = vmatpush1.msra.mxu0 0.0
        %394 = vmatprep.subr.mxu0 0.0
        %395 = vmatpush1.msra.mxu0 0.0
        %396 = vmatprep.subr.mxu0 0.0
        %397 = vmatpush1.msra.mxu0 0.0
        %398 = vmatprep.subr.mxu0 0.0
        %399 = vmatpush1.msra.mxu0 0.0
        %400 = vmatprep.subr.mxu0 0.0
        %401 = vmatpush1.msra.mxu0 0.0
        %402 = vmatprep.subr.mxu0 0.0
        %403 = vmatpush1.msra.mxu0 0.0
        %404 = vmatprep.subr.mxu0 0.0
        %405 = vmatpush1.msra.mxu0 0.0
        %406 = vmatprep.subr.mxu0 0.0
        %407 = vmatpush1.msra.mxu0 0.0
        %408 = vmatprep.subr.mxu0 0.0
        %409 = vmatpush1.msra.mxu0 0.0
        %410 = vmatprep.subr.mxu0 0.0
        %411 = vmatpush1.msra.mxu0 0.0
        %412 = vmatprep.subr.mxu0 0.0
        %413 = vmatpush1.msra.mxu0 0.0
        %414 = vmatprep.mubr.f32.mxu0 0.0
        %415 = vmatmul.mubr.f32.gmra.mrb[0].mxu0 %v344
        %v416 = vpop.f32.mrb[0].mxu0
        %v417 = vadd.f32 0.0, %v416
        %v418 = vpop.f32.mrb[0].mxu0
        %419 = vdwg.mxu0
        %v420 = vxor.u32 %v417, 2147483648
        %v421 = vmul.f32 %v420, 1.442695
        %v422 = vpow.pop %v421
        %v423 = vadd.f32 %v422, 1.0
        %v424 = vrcp.pop %v423
        %v425 = vmul.f32 1.0, %v424
        %427 = vset.pattern.permute.xlu0 0
        %428 = vperm.xlu0 %427, %v425
        %v429 = vpop.permute.xlu0 %428
        %v431 = vunpack.c.l.s4 839922192
        %v432 = vunpack.c.0.s8 %v431
        %v433 = vlaneseq
        %v434 = vshrl.u32 %v433, 7
        %v435 = vsub.s32 %v432, %v434
        %v436 = vrot.slane %v429, %v435
        %v438 = vmul.f32 %v187, %v436
        %439 = vst [vmem:[%s186] sm:$0xff] %v438
        %s440 = sand.u32 %s96, 1
        %s441 = scalar_lea.sflag [#allocation4], %s440
        %s442 = sand.u32 %s96, 1
        %s443 = smul.addr %s442, 8
        %s444 = scalar_lea.vmem [#allocation5], %s443
        // Predicated region
        $region37: #{tpu_custom_call.1} parent=31 // pred_check
          %p445 = pneg %p106
        $region38: #{tpu_custom_call.1} parent=31 // pred_check_branch
          %447 = sbr.rel (%p445) target = $region40
        $region39: #{tpu_custom_call.1} parent=31 // pred_region
          %s449 = ssub.s32 128, 128
          %450 = vsyncadd %s441, %s449
          %s451 = smul.addr %s20, 2
          %s452 = smul.addr %s451, 64
          %s453 = scalar_lea.hbm %s3, %s452
          %s455 = sshll.u32 %s444, 4
          %s456 = int_to_ptr.vmem [resolvable:$true] %s455
          %458 = dma.vmem_to_hbm [thread:$0]  %s456, 128, %s453, %s441
        $region40: #{tpu_custom_call.1} parent=31 // pred_fallthru
          _
      $region32: #{tpu_custom_call.1} parent=5 // pred_fallthru
        _
      %p459 = scmp.le.s32.totalorder 2, %s15
      // Predicated region
      $region41: #{tpu_custom_call.1} parent=5 // pred_check
        %p460 = pneg %p459
      $region42: #{tpu_custom_call.1} parent=5 // pred_check_branch
        %462 = sbr.rel (%p460) target = $region44
      $region43: #{tpu_custom_call.1} parent=5 // pred_region
        %s463 = ssub.s32 %s15, 2
        // Predicated region
        $region45: #{tpu_custom_call.1} parent=43 // pred_check
          %p464 = pneg %p112
        $region46: #{tpu_custom_call.1} parent=43 // pred_check_branch
          %466 = sbr.rel (%p464) target = $region48
        $region47: #{tpu_custom_call.1} parent=43 // pred_region
          %s467 = sand.u32 %s97, 1
          %s468 = scalar_lea.sflag [#allocation4], %s467
          %s469 = sand.u32 %s97, 1
          %s470 = smul.addr %s469, 8
          %s471 = scalar_lea.vmem [#allocation5], %s470
          %472 = dma.done %s468, 128
        $region48: #{tpu_custom_call.1} parent=43 // pred_fallthru
          _
      $region44: #{tpu_custom_call.1} parent=5 // pred_fallthru
        _
    $region6: #{tpu_custom_call.1} parent=1 // loop_footer
      %s19 = sadd.s32 1, %s15
    $region7: #{tpu_custom_call.1} parent=1 // loop_footer_branch
      %14 = sbr.rel target = $region3
    $region8: #{tpu_custom_call.1} parent=1 // loop_exit
      _
    %473 = vsyncpa [#allocation3], 1
    %s474 = scalar_lea.sflag [#allocation3], 1
    %475 = vsyncpa %s474, 1
    %476 = vsyncpa [#allocation4], 1
    %s477 = scalar_lea.sflag [#allocation4], 1
    %478 = vsyncpa %s477, 1

</llo_original>
